<compile_context>
chip_gen: v5e
topology: v5e:2x2
jax: 0.10.0
libtpu: 0.0.40
codegen_flags: <defaults>
</compile_context>

<pallas_src>
import jax
import jax.numpy as jnp
from jax.experimental import pallas as pl
from jax.experimental.pallas import tpu as pltpu


def _round_up(v, m):
    return ((v + m - 1) // m) * m


def _pick_tiles(M, K, N):
    """MXU/lane-friendly tiles that fit comfortably in VMEM on v5e/v6e/v7x."""
    tm = 128 if M >= 128 else _round_up(max(M, 1), 8)
    tk = 512 if K >= 512 else _round_up(max(K, 1), 128)
    tn = 256 if N >= 256 else 128
    return tm, tn, tk


def _linear_kernel_multi_k(x_ref, wt_ref, b_ref, o_ref, acc_ref):
    """One (tm, tn) tile of x @ W^T + b; k (reduction) is the last grid axis."""
    k = pl.program_id(2)

    @pl.when(k == 0)
    def _init():
        # Fold bias into the accumulator init: epilogue becomes a pure cast/store.
        acc_ref[...] = jnp.broadcast_to(
            b_ref[...], acc_ref.shape).astype(jnp.float32)

    acc_ref[...] += jnp.dot(x_ref[...], wt_ref[...],
                            preferred_element_type=jnp.float32)

    @pl.when(k == pl.num_programs(2) - 1)
    def _store():
        o_ref[...] = acc_ref[...].astype(o_ref.dtype)


def _linear_kernel_single_k(x_ref, wt_ref, b_ref, o_ref):
    """K fits in one tile: no accumulator scratch, no pl.when — dot + bias + store."""
    o_ref[...] = (
        jnp.dot(x_ref[...], wt_ref[...], preferred_element_type=jnp.float32)
        + b_ref[...]
    ).astype(o_ref.dtype)


def linear_pallas(x, w_t_pad, b_pad, out_size, tiles):
    """x: [B, in], w_t_pad: [K_pad, N_pad] (pre-transposed, zero-padded),
    b_pad: [1, N_pad] -> [B, out_size]."""
    tm, tn, tk = tiles
    B, K = x.shape
    K_pad, N_pad = w_t_pad.shape
    M_pad = _round_up(B, tm)

    # Only the (small) activation may need per-call padding; weight was padded once.
    x_pad = x if (M_pad == B and K_pad == K) else jnp.pad(
        x, ((0, M_pad - B), (0, K_pad - K)))

    nk = K_pad // tk
    grid = (M_pad // tm, N_pad // tn, nk)

    in_specs = [
        pl.BlockSpec((tm, tk), lambda i, j, k: (i, k)),
        pl.BlockSpec((tk, tn), lambda i, j, k: (k, j)),
        pl.BlockSpec((1, tn), lambda i, j, k: (0, j)),
    ]
    out_spec = pl.BlockSpec((tm, tn), lambda i, j, k: (i, j))

    if nk == 1:
        kernel = _linear_kernel_single_k
        scratch = []
    else:
        kernel = _linear_kernel_multi_k
        scratch = [pltpu.VMEM((tm, tn), jnp.float32)]

    out_pad = pl.pallas_call(
        kernel,
        out_shape=jax.ShapeDtypeStruct((M_pad, N_pad), x.dtype),
        grid_spec=pltpu.PrefetchScalarGridSpec(
            num_scalar_prefetch=0,
            grid=grid,
            in_specs=in_specs,
            out_specs=out_spec,
            scratch_shapes=scratch,
        ),
        compiler_params=pltpu.CompilerParams(
            dimension_semantics=("parallel", "parallel", "arbitrary")),
    )(x_pad, w_t_pad, b_pad)

    return out_pad[:B, :out_size]


class TestNNPallas:
    """JAX/Pallas equivalent of _TestNN: forward(x, hidden) -> (decoder(x), hidden)."""

    def __init__(self, input_size, output_size, key):
        k_w, k_b = jax.random.split(key)
        # Deterministic init mimicking torch.nn.Linear's U(-1/sqrt(in), 1/sqrt(in))
        bound = 1.0 / (input_size ** 0.5)
        self.weight = jax.random.uniform(
            k_w, (output_size, input_size), jnp.float32, -bound, bound)
        self.bias = jax.random.uniform(
            k_b, (output_size,), jnp.float32, -bound, bound)
        self.input_size = input_size
        self.output_size = output_size

        # Pre-transpose + pad ONCE: removes the per-forward weight-transpose HBM
        # round trip and makes the output N dim a lane-dense multiple of 128.
        _, self._tn, self._tk = _pick_tiles(8, input_size, output_size)
        k_pad = _round_up(input_size, self._tk)
        n_pad = _round_up(output_size, self._tn)
        self.w_t_pad = (jnp.zeros((k_pad, n_pad), jnp.float32)
                        .at[:input_size, :output_size].set(self.weight.T))
        self.b_pad = (jnp.zeros((1, n_pad), jnp.float32)
                      .at[0, :output_size].set(self.bias))
        self.forward_called = False

    def forward(self, nn_input, hidden):
        self.forward_called = True
        B = nn_input.shape[0]
        tm = 128 if B >= 128 else _round_up(B, 8)
        output = linear_pallas(nn_input, self.w_t_pad, self.b_pad,
                               self.output_size, (tm, self._tn, self._tk))
        return (output, hidden)


if __name__ == "__main__":
    key = jax.random.PRNGKey(0)
    k_in, k_hid, k_params = jax.random.split(key, 3)

    batch, input_size, output_size, hidden_size = 8, 32, 16, 32

    nn_input = jax.random.normal(k_in, (batch, input_size), jnp.float32)
    hidden = jax.random.normal(k_hid, (batch, hidden_size), jnp.float32)

    model = TestNNPallas(input_size, output_size, k_params)
    output, hidden_out = model.forward(nn_input, hidden)
    jax.block_until_ready((output, hidden_out))

    # Correctness check against plain-JAX reference of nn.Linear
    ref = nn_input @ model.weight.T + model.bias
    assert output.shape == (batch, output_size)
    assert hidden_out.shape == (batch, hidden_size)
    assert jnp.allclose(output, ref, atol=1e-5, rtol=1e-5)
    assert jnp.array_equal(hidden_out, hidden)

    print("KERNEL_OK")
</pallas_src>

<mosaic_0001>
module attributes {stable_mosaic.version = 11 : i64} {
  func.func @_linear_kernel_single_k(%arg0: i32, %arg1: i32, %arg2: i32, %arg3: memref<8x128xf32, #tpu.memory_space<vmem>>, %arg4: memref<128x128xf32, #tpu.memory_space<vmem>>, %arg5: memref<1x128xf32, #tpu.memory_space<vmem>>, %arg6: memref<8x128xf32, #tpu.memory_space<vmem>>) attributes {dimension_semantics = [#tpu.dimension_semantics<parallel>, #tpu.dimension_semantics<parallel>, #tpu.dimension_semantics<arbitrary>], iteration_bounds = array<i64: 1, 1, 1>, scalar_prefetch = 0 : i64, scratch_operands = 0 : i64, tpu.core_type = #tpu.core_type<tc>, window_params = [{transform_indices = @transform_0, window_bounds = array<i64: 8, 128>}, {transform_indices = @transform_1, window_bounds = array<i64: 128, 128>}, {transform_indices = @transform_2, window_bounds = array<i64: 1, 128>}, {transform_indices = @transform_3, window_bounds = array<i64: 8, 128>}]} {
    %c0 = arith.constant 0 : index
    %c0_0 = arith.constant 0 : index
    %0 = vector.load %arg3[%c0, %c0_0] : memref<8x128xf32, #tpu.memory_space<vmem>>, vector<8x128xf32>
    %c0_1 = arith.constant 0 : index
    %c0_2 = arith.constant 0 : index
    %1 = vector.load %arg4[%c0_1, %c0_2] : memref<128x128xf32, #tpu.memory_space<vmem>>, vector<128x128xf32>
    %cst = arith.constant dense<0.000000e+00> : vector<8x128xf32>
    %2 = tpu.matmul %0, %1, %cst {dimension_numbers = #tpu.dot_dimension_numbers<[1], [0], [0], [1], [0, 0, 1, 1], [], []>} : vector<8x128xf32>, vector<128x128xf32>, vector<8x128xf32> -> vector<8x128xf32>
    %c0_3 = arith.constant 0 : index
    %c0_4 = arith.constant 0 : index
    %3 = vector.load %arg5[%c0_3, %c0_4] : memref<1x128xf32, #tpu.memory_space<vmem>>, vector<1x128xf32>
    %4 = vector.broadcast %3 : vector<1x128xf32> to vector<8x128xf32>
    %5 = arith.addf %2, %4 : vector<8x128xf32>
    %c0_5 = arith.constant 0 : index
    %c0_6 = arith.constant 0 : index
    %6 = vector.load %arg6[%c0_5, %c0_6] : memref<8x128xf32, #tpu.memory_space<vmem>>, vector<8x128xf32>
    tpu.vector_store %arg6[%c0_5, %c0_6], %5 {strides = array<i32>} : memref<8x128xf32, #tpu.memory_space<vmem>>, vector<8x128xf32>,
    return
  }
  func.func @transform_0(%arg0: i32, %arg1: i32, %arg2: i32) -> (i32, i32) {
    %c0_i32 = arith.constant 0 : i32
    return %arg0, %arg2 : i32, i32
  }
  func.func @transform_1(%arg0: i32, %arg1: i32, %arg2: i32) -> (i32, i32) {
    %c0_i32 = arith.constant 0 : i32
    return %arg2, %arg1 : i32, i32
  }
  func.func @transform_2(%arg0: i32, %arg1: i32, %arg2: i32) -> (i32, i32) {
    %c0_i32 = arith.constant 0 : i32
    %c0_i32_0 = arith.constant 0 : i32
    return %c0_i32, %arg1 : i32, i32
  }
  func.func @transform_3(%arg0: i32, %arg1: i32, %arg2: i32) -> (i32, i32) {
    %c0_i32 = arith.constant 0 : i32
    return %arg0, %arg1 : i32, i32
  }
}

</mosaic_0001>

<llo_original>
// kernel: tpu_custom_call.1
$region0: #{tpu_custom_call.1}
  #allocation0 [shape = 'u32[]', space=smem, size = 0x4, offset = 0x4, fixed_abs, tag = 'smem constant byte address 0x4 - core index']
  #allocation1 [shape = 'u32[72,128]{1,0:T(1,128)}', space=vmem, size = 0x9000, scoped, tag = 'internal scratch']
  %s0 = inlined_call_operand.hbm [shape: f32[8,128], index: 0, kind: input, shape index: {}]
  %s1 = inlined_call_operand.hbm [shape: f32[128,128], index: 1, kind: input, shape index: {}]
  %s2 = inlined_call_operand.vmem [shape: f32[1,128], index: 2, kind: input, shape index: {}]
  %s3 = inlined_call_operand.hbm [shape: f32[8,128], index: 3, kind: output, shape index: {}]
  %s4 = sld [smem:[#allocation0]]
  $region30: #{tpu_custom_call.1} parent=0
    _
  %s6 = ssub.s32 1, %s4
  %s7 = scalar_select 0, %s6, %s4
  $region1: #{tpu_custom_call.1} parent=0
    #allocation2 [shape = 'u8[4096]{0}', space=vmem, size = 0x1000, scoped, tag = 'input window, operand 0, single buffered']
    #allocation3 [shape = 's32[1]{0}', space=sflag, size = 0x4, scoped, tag = 'scoped memory for tpu_custom_call.1']
    #allocation4 [shape = 's32[1]{0}', space=sflag, size = 0x4, scoped, tag = 'scoped memory for tpu_custom_call.1']
    #allocation5 [shape = 'u8[65536]{0}', space=vmem, size = 0x10000, scoped, tag = 'input window, operand 1, single buffered']
    #allocation6 [shape = 's32[1]{0}', space=sflag, size = 0x4, scoped, tag = 'scoped memory for tpu_custom_call.1']
    #allocation7 [shape = 'u8[4096]{0}', space=vmem, size = 0x1000, scoped, tag = 'output window, operand 0, single buffered']
    %8 = vsyncpa [#allocation3], 0
    %9 = vsyncpa [#allocation6], 0
    %10 = vsyncpa [#allocation4], 0
    // Predicated region
    $region2: #{tpu_custom_call.1} parent=1 // pred_check
      _
    $region3: #{tpu_custom_call.1} parent=1 // pred_check_branch
      %12 = sbr.rel (0) target = $region5
    $region4: #{tpu_custom_call.1} parent=1 // pred_region
      %14 = vsyncadd [#allocation3], 0
      %s16 = sshll.u32 %s0, 4
      %s17 = int_to_ptr.hbm [resolvable:$true] %s16
      %s18 = sshll.u32 [#allocation2], 4
      %s19 = int_to_ptr.vmem [resolvable:$true] %s18
      %21 = dma.hbm_to_vmem [thread:$0]  %s17, 128, %s19, [#allocation3]
    $region5: #{tpu_custom_call.1} parent=1 // pred_fallthru
      _
    // Predicated region
    $region6: #{tpu_custom_call.1} parent=1 // pred_check
      _
    $region7: #{tpu_custom_call.1} parent=1 // pred_check_branch
      %23 = sbr.rel (0) target = $region9
    $region8: #{tpu_custom_call.1} parent=1 // pred_region
      %25 = vsyncadd [#allocation6], 0
      %s26 = sshll.u32 %s1, 4
      %s27 = int_to_ptr.hbm [resolvable:$true] %s26
      %s28 = sshll.u32 [#allocation5], 4
      %s29 = int_to_ptr.vmem [resolvable:$true] %s28
      %34 = dma.hbm_to_vmem [thread:$0]  %s27, 2048, %s29, [#allocation6], 128, 128, 8
    $region9: #{tpu_custom_call.1} parent=1 // pred_fallthru
      _
    // Predicated region
    $region10: #{tpu_custom_call.1} parent=1 // pred_check
      _
    $region11: #{tpu_custom_call.1} parent=1 // pred_check_branch
      %36 = sbr.rel (0) target = $region13
    $region12: #{tpu_custom_call.1} parent=1 // pred_region
      _
    $region13: #{tpu_custom_call.1} parent=1 // pred_fallthru
      _
    // Predicated region
    $region14: #{tpu_custom_call.1} parent=1 // pred_check
      _
    $region15: #{tpu_custom_call.1} parent=1 // pred_check_branch
      %38 = sbr.rel (0) target = $region17
    $region16: #{tpu_custom_call.1} parent=1 // pred_region
      %40 = dma.done [#allocation3], 128
    $region17: #{tpu_custom_call.1} parent=1 // pred_fallthru
      _
    // Predicated region
    $region18: #{tpu_custom_call.1} parent=1 // pred_check
      _
    $region19: #{tpu_custom_call.1} parent=1 // pred_check_branch
      %42 = sbr.rel (0) target = $region21
    $region20: #{tpu_custom_call.1} parent=1 // pred_region
      %44 = dma.done [#allocation6], 2048
    $region21: #{tpu_custom_call.1} parent=1 // pred_fallthru
      _
    %v45 = vld [vmem:[#allocation2] sm:$0xff]
    %v46 = vld [vmem:[#allocation5] sm:$0xff]
    %v47 = vld [vmem:[#allocation5 + $0x8] sm:$0xff]
    %v48 = vld [vmem:[#allocation5 + $0x10] sm:$0xff]
    %v49 = vld [vmem:[#allocation5 + $0x18] sm:$0xff]
    %v50 = vld [vmem:[#allocation5 + $0x20] sm:$0xff]
    %v51 = vld [vmem:[#allocation5 + $0x28] sm:$0xff]
    %v52 = vld [vmem:[#allocation5 + $0x30] sm:$0xff]
    %v53 = vld [vmem:[#allocation5 + $0x38] sm:$0xff]
    %v54 = vld [vmem:[#allocation5 + $0x40] sm:$0xff]
    %v55 = vld [vmem:[#allocation5 + $0x48] sm:$0xff]
    %v56 = vld [vmem:[#allocation5 + $0x50] sm:$0xff]
    %v57 = vld [vmem:[#allocation5 + $0x58] sm:$0xff]
    %v58 = vld [vmem:[#allocation5 + $0x60] sm:$0xff]
    %v59 = vld [vmem:[#allocation5 + $0x68] sm:$0xff]
    %v60 = vld [vmem:[#allocation5 + $0x70] sm:$0xff]
    %v61 = vld [vmem:[#allocation5 + $0x78] sm:$0xff]
    %v62 = vld [vmem:[%s2] sm:$0x1]
    %v64 = vperm.slane %v62, 0
    %66 = vmatpush.msra.mxu0 %v61
    %67 = vmatpush.msra.mxu0 %v60
    %68 = vmatpush.msra.mxu0 %v59
    %69 = vmatpush.msra.mxu0 %v58
    %70 = vmatpush.msra.mxu0 %v57
    %71 = vmatpush.msra.mxu0 %v56
    %72 = vmatpush.msra.mxu0 %v55
    %73 = vmatpush.msra.mxu0 %v54
    %74 = vmatpush.msra.mxu0 %v53
    %75 = vmatpush.msra.mxu0 %v52
    %76 = vmatpush.msra.mxu0 %v51
    %77 = vmatpush.msra.mxu0 %v50
    %78 = vmatpush.msra.mxu0 %v49
    %79 = vmatpush.msra.mxu0 %v48
    %80 = vmatpush.msra.mxu0 %v47
    %81 = vmatpush.msra.mxu0 %v46
    %82 = vmatmul.f32.gmra.mxu0 %v45
    %v83 = vpop.f32.mrf.mxu0
    %v84 = vadd.f32 %v64, %v83
    %85 = vdwg.mxu0
    %86 = vst [vmem:[#allocation7] sm:$0xff] %v84
    // Predicated region
    $region22: #{tpu_custom_call.1} parent=1 // pred_check
      _
    $region23: #{tpu_custom_call.1} parent=1 // pred_check_branch
      %88 = sbr.rel (0) target = $region25
    $region24: #{tpu_custom_call.1} parent=1 // pred_region
      %90 = vsyncadd [#allocation4], 0
      %s92 = sshll.u32 [#allocation7], 4
      %s93 = int_to_ptr.vmem [resolvable:$true] %s92
      %s94 = sshll.u32 %s3, 4
      %s95 = int_to_ptr.hbm [resolvable:$true] %s94
      %97 = dma.vmem_to_hbm [thread:$0]  %s93, 128, %s95, [#allocation4]
    $region25: #{tpu_custom_call.1} parent=1 // pred_fallthru
      _
    // Predicated region
    $region26: #{tpu_custom_call.1} parent=1 // pred_check
      _
    $region27: #{tpu_custom_call.1} parent=1 // pred_check_branch
      %99 = sbr.rel (0) target = $region29
    $region28: #{tpu_custom_call.1} parent=1 // pred_region
      %101 = dma.done [#allocation4], 128
    $region29: #{tpu_custom_call.1} parent=1 // pred_fallthru
      _
    %102 = vsyncpa [#allocation3], 1
    %103 = vsyncpa [#allocation6], 1
    %104 = vsyncpa [#allocation4], 1

</llo_original>
